<compile_context>
chip_gen: v7x
topology: tpu7x:2x2x1
jax: 0.10.0
libtpu: 0.0.40
codegen_flags: <defaults>
</compile_context>

<pallas_src>
import jax
import jax.numpy as jnp
from jax.experimental import pallas as pl
from jax.experimental.pallas import tpu as pltpu


def _round_up(x: int, m: int) -> int:
    return ((x + m - 1) // m) * m


def smallrho_kernel(xt_ref, w_ref, b_ref, ot_ref):
    # xt_ref: [D_in, TB] bf16 (streamed tile)
    # w_ref : [D_out, D_in] bf16 (resident)
    # b_ref : [D_out, 1]   f32  (resident, per-sublane constant)
    # ot_ref: [D_out, TB]  out dtype (lane-dense store)
    y = jnp.dot(w_ref[...], xt_ref[...], preferred_element_type=jnp.float32)
    y = y + b_ref[...]                       # broadcast over the lane axis
    ot_ref[...] = jnp.maximum(y, 0.0).astype(ot_ref.dtype)


def smallrho_forward(x, w, b, *, tb_max: int = 2048):
    """SmallRho.forward (eval mode).

    x: [B, D_in] activations.
    w: [D_out, D_in]  (PyTorch nn.Linear weight layout — used directly,
                       no pre-transpose needed in the transposed formulation).
    b: [D_out] bias.
    Returns relu(x @ w.T + b) with shape [B, D_out].
    """
    B, D_in = x.shape
    D_out = w.shape[0]
    out_dtype = x.dtype

    # Lane-dense layout: pad the batch (lane) axis to a multiple of the tile,
    # tile must itself be a multiple of 128 lanes.
    TB = min(tb_max, _round_up(B, 128))
    B_pad = _round_up(B, TB)

    x_t = jnp.transpose(x)                                  # [D_in, B]
    if B_pad != B:
        x_t = jnp.pad(x_t, ((0, 0), (0, B_pad - B)))
    x_t = x_t.astype(jnp.bfloat16)                          # halve HBM bytes
    w_b = w.astype(jnp.bfloat16)
    b2 = b.reshape(D_out, 1).astype(jnp.float32)            # f32 epilogue

    out_itemsize = jnp.dtype(out_dtype).itemsize
    cost = pl.CostEstimate(
        flops=2 * B_pad * D_in * D_out,
        transcendentals=0,
        bytes_accessed=(x_t.size * 2 + w_b.size * 2 + b2.size * 4
                        + D_out * B_pad * out_itemsize),
    )

    out_t = pl.pallas_call(
        smallrho_kernel,
        out_shape=jax.ShapeDtypeStruct((D_out, B_pad), out_dtype),
        grid_spec=pltpu.PrefetchScalarGridSpec(
            num_scalar_prefetch=0,
            grid=(B_pad // TB,),
            in_specs=[
                # Streamed activation tile (double-buffered by the pipeline).
                pl.BlockSpec((D_in, TB), lambda i: (0, i)),
                # Weight and bias: constant block index -> resident in VMEM.
                pl.BlockSpec((D_out, D_in), lambda i: (0, 0)),
                pl.BlockSpec((D_out, 1), lambda i: (0, 0)),
            ],
            out_specs=pl.BlockSpec((D_out, TB), lambda i: (0, i)),
        ),
        compiler_params=pltpu.CompilerParams(
            dimension_semantics=("parallel",),      # shards over 2 TCs on v7x
            vmem_limit_bytes=32 * 1024 * 1024,      # fits v7x 64 MiB physical
        ),
        cost_estimate=cost,
    )(x_t, w_b, b2)

    # Layout plumbing only: back to [B, D_out], drop batch padding.
    return jnp.transpose(out_t)[:B]


def init_params(key, input_size, output_size, dtype=jnp.float32):
    """Deterministic init mimicking nn.Linear: U(-1/sqrt(fan_in), 1/sqrt(fan_in)).

    Weight kept in the native PyTorch layout [output_size, input_size].
    """
    k_w, k_b = jax.random.split(key)
    bound = 1.0 / (input_size ** 0.5)
    w = jax.random.uniform(k_w, (output_size, input_size), dtype,
                           minval=-bound, maxval=bound)
    b = jax.random.uniform(k_b, (output_size,), dtype,
                           minval=-bound, maxval=bound)
    return w, b


if __name__ == "__main__":
    key = jax.random.PRNGKey(0)
    k_x, k_p = jax.random.split(key)

    batch = 8
    input_size = 32
    output_size = 8

    x = jax.random.normal(k_x, (batch, input_size), dtype=jnp.float32)
    w, b = init_params(k_p, input_size, output_size)

    out = smallrho_forward(x, w, b)
    out = jax.block_until_ready(out)

    # Reference (same bf16 operand rounding as the kernel, f32 accumulate).
    x_bf = x.astype(jnp.bfloat16).astype(jnp.float32)
    w_bf = w.astype(jnp.bfloat16).astype(jnp.float32)
    ref = jnp.maximum(x_bf @ w_bf.T + b, 0.0)

    assert out.shape == (batch, output_size)
    assert jnp.allclose(out, ref, atol=1e-3, rtol=1e-3)

    print("KERNEL_OK")
</pallas_src>

<mosaic_0001>
module attributes {stable_mosaic.version = 11 : i64} {
  func.func @smallrho_kernel(%arg0: i32, %arg1: memref<32x128xbf16, #tpu.memory_space<vmem>>, %arg2: memref<8x32xbf16, #tpu.memory_space<vmem>>, %arg3: memref<8x1xf32, #tpu.memory_space<vmem>>, %arg4: memref<8x128xf32, #tpu.memory_space<vmem>>) attributes {dimension_semantics = [#tpu.dimension_semantics<parallel>], iteration_bounds = array<i64: 1>, scalar_prefetch = 0 : i64, scratch_operands = 0 : i64, tpu.core_type = #tpu.core_type<tc>, window_params = [{transform_indices = @transform_0, window_bounds = array<i64: 32, 128>}, {pipeline_mode = #tpu.pipeline_mode<synchronous>, transform_indices = @transform_1, window_bounds = array<i64: 8, 32>}, {pipeline_mode = #tpu.pipeline_mode<synchronous>, transform_indices = @transform_2, window_bounds = array<i64: 8, 1>}, {transform_indices = @transform_3, window_bounds = array<i64: 8, 128>}]} {
    %c0 = arith.constant 0 : index
    %c0_0 = arith.constant 0 : index
    %0 = vector.load %arg2[%c0, %c0_0] : memref<8x32xbf16, #tpu.memory_space<vmem>>, vector<8x32xbf16>
    %c0_1 = arith.constant 0 : index
    %c0_2 = arith.constant 0 : index
    %1 = vector.load %arg1[%c0_1, %c0_2] : memref<32x128xbf16, #tpu.memory_space<vmem>>, vector<32x128xbf16>
    %cst = arith.constant dense<0.000000e+00> : vector<8x128xf32>
    %2 = tpu.matmul %0, %1, %cst {dimension_numbers = #tpu.dot_dimension_numbers<[1], [0], [0], [1], [0, 0, 1, 1], [], []>} : vector<8x32xbf16>, vector<32x128xbf16>, vector<8x128xf32> -> vector<8x128xf32>
    %c0_3 = arith.constant 0 : index
    %c0_4 = arith.constant 0 : index
    %3 = vector.load %arg3[%c0_3, %c0_4] : memref<8x1xf32, #tpu.memory_space<vmem>>, vector<8x1xf32>
    %4 = vector.broadcast %3 : vector<8x1xf32> to vector<8x128xf32>
    %5 = arith.addf %2, %4 : vector<8x128xf32>
    %cst_5 = arith.constant 0.000000e+00 : f32
    %6 = vector.broadcast %cst_5 : f32 to vector<8x128xf32>
    %7 = arith.maximumf %5, %6 : vector<8x128xf32>
    %c0_6 = arith.constant 0 : index
    %c0_7 = arith.constant 0 : index
    %8 = vector.load %arg4[%c0_6, %c0_7] : memref<8x128xf32, #tpu.memory_space<vmem>>, vector<8x128xf32>
    tpu.vector_store %arg4[%c0_6, %c0_7], %7 {strides = array<i32>} : memref<8x128xf32, #tpu.memory_space<vmem>>, vector<8x128xf32>,
    return
  }
  func.func @transform_0(%arg0: i32) -> (i32, i32) {
    %c0_i32 = arith.constant 0 : i32
    %c0_i32_0 = arith.constant 0 : i32
    return %c0_i32, %arg0 : i32, i32
  }
  func.func @transform_1(%arg0: i32) -> (i32, i32) {
    %c0_i32 = arith.constant 0 : i32
    %c0_i32_0 = arith.constant 0 : i32
    %c0_i32_1 = arith.constant 0 : i32
    return %c0_i32, %c0_i32_0 : i32, i32
  }
  func.func @transform_2(%arg0: i32) -> (i32, i32) {
    %c0_i32 = arith.constant 0 : i32
    %c0_i32_0 = arith.constant 0 : i32
    %c0_i32_1 = arith.constant 0 : i32
    return %c0_i32, %c0_i32_0 : i32, i32
  }
  func.func @transform_3(%arg0: i32) -> (i32, i32) {
    %c0_i32 = arith.constant 0 : i32
    %c0_i32_0 = arith.constant 0 : i32
    return %c0_i32, %arg0 : i32, i32
  }
}

</mosaic_0001>

<llo_original>
// kernel: tpu_custom_call.1
$region0: #{tpu_custom_call.1}
  #allocation0 [shape = 'u32[]', space=smem, size = 0x4, offset = 0x4, fixed_abs, tag = 'smem constant byte address 0x4 - core index']
  #allocation1 [shape = 'u32[144,128]{1,0:T(1,128)}', space=vmem, size = 0x12000, scoped, tag = 'internal scratch']
  %s0 = inlined_call_operand.hbm [shape: bf16[32,128], index: 0, kind: input, shape index: {}]
  %s1 = inlined_call_operand.vmem [shape: bf16[8,32], index: 1, kind: input, shape index: {}]
  %s2 = inlined_call_operand.vmem [shape: f32[8,1], index: 2, kind: input, shape index: {}]
  %s3 = inlined_call_operand.hbm [shape: f32[8,128], index: 3, kind: output, shape index: {}]
  %s4 = sld [smem:[#allocation0]]
  $region26: #{tpu_custom_call.1} parent=0
    _
  %s6 = ssub.s32 1, %s4
  %s7 = scalar_select 0, %s6, %s4
  $region1: #{tpu_custom_call.1} parent=0
    #allocation2 [shape = 'u8[8192]{0}', space=vmem, size = 0x2000, scoped, tag = 'input window, operand 0, single buffered']
    #allocation3 [shape = 's32[1]{0}', space=sflag, size = 0x4, scoped, tag = 'scoped memory for tpu_custom_call.1']
    #allocation4 [shape = 's32[1]{0}', space=sflag, size = 0x4, scoped, tag = 'scoped memory for tpu_custom_call.1']
    #allocation5 [shape = 'u8[4096]{0}', space=vmem, size = 0x1000, scoped, tag = 'output window, operand 0, single buffered']
    %8 = vsyncpa [#allocation3], 0
    %9 = vsyncpa [#allocation4], 0
    // Predicated region
    $region2: #{tpu_custom_call.1} parent=1 // pred_check
      _
    $region3: #{tpu_custom_call.1} parent=1 // pred_check_branch
      %11 = sbr.rel (0) target = $region5
    $region4: #{tpu_custom_call.1} parent=1 // pred_region
      %s13 = ssub.s32 256, 256
      %14 = vsyncadd [#allocation3], %s13
      %s15 = sshll.u32 [#allocation2], 4
      %s16 = int_to_ptr.vmem [resolvable:$true] %s15
      %21 = dma.hbm_to_vmem [thread:$0]  %s0, 256, %s16, [#allocation3], 64, 64, 4
    $region5: #{tpu_custom_call.1} parent=1 // pred_fallthru
      _
    // Predicated region
    $region6: #{tpu_custom_call.1} parent=1 // pred_check
      _
    $region7: #{tpu_custom_call.1} parent=1 // pred_check_branch
      %23 = sbr.rel (0) target = $region9
    $region8: #{tpu_custom_call.1} parent=1 // pred_region
      _
    $region9: #{tpu_custom_call.1} parent=1 // pred_fallthru
      _
    // Predicated region
    $region10: #{tpu_custom_call.1} parent=1 // pred_check
      _
    $region11: #{tpu_custom_call.1} parent=1 // pred_check_branch
      %25 = sbr.rel (0) target = $region13
    $region12: #{tpu_custom_call.1} parent=1 // pred_region
      _
    $region13: #{tpu_custom_call.1} parent=1 // pred_fallthru
      _
    // Predicated region
    $region14: #{tpu_custom_call.1} parent=1 // pred_check
      _
    $region15: #{tpu_custom_call.1} parent=1 // pred_check_branch
      %27 = sbr.rel (0) target = $region17
    $region16: #{tpu_custom_call.1} parent=1 // pred_region
      %28 = dma.done [#allocation3], 256
    $region17: #{tpu_custom_call.1} parent=1 // pred_fallthru
      _
    %v30 = vld [vmem:[%s1] sm:$0xf]
    %v31 = vld [vmem:[#allocation2] sm:$0xf]
    %v32 = vld [vmem:[#allocation2 + $0x4] sm:$0xf]
    %v33 = vld [vmem:[#allocation2 + $0x8] sm:$0xf]
    %v34 = vld [vmem:[#allocation2 + $0xc] sm:$0xf]
    %v35 = vld [vmem:[%s2] sm:$0xff]
    %37 = vset.pattern.permute.xlu0 0
    %38 = vperm.xlu0 %37, %v35
    %v39 = vpop.permute.xlu0 %38
    %v45 = vunpack.c.l.b16 %v31
    %v46 = vunpack.c.l.b16 %v32
    %v47 = vunpack.c.l.b16 %v33
    %v48 = vunpack.c.l.b16 %v34
    %v49 = vpack.c.b16 %v46, %v45
    %v50 = vpack.c.b16 %v48, %v47
    %vm53 = vcmask 261120
    %v55 = vsel %vm53, %v30, 0
    %57 = vmatprep.subr.bf16.mxu0 0
    %58 = vmatpush1.bf16.msra.mxu0 %v49
    %59 = vmatprep.subr.bf16.mxu0 0
    %60 = vmatpush1.bf16.msra.mxu0 %v50
    %61 = vmatprep.subr.bf16.mxu0 0
    %62 = vmatpush1.bf16.msra.mxu0 0
    %63 = vmatprep.subr.bf16.mxu0 0
    %64 = vmatpush1.bf16.msra.mxu0 0
    %65 = vmatprep.subr.bf16.mxu0 0
    %66 = vmatpush1.bf16.msra.mxu0 0
    %67 = vmatprep.subr.bf16.mxu0 0
    %68 = vmatpush1.bf16.msra.mxu0 0
    %69 = vmatprep.subr.bf16.mxu0 0
    %70 = vmatpush1.bf16.msra.mxu0 0
    %71 = vmatprep.subr.bf16.mxu0 0
    %72 = vmatpush1.bf16.msra.mxu0 0
    %73 = vmatprep.subr.bf16.mxu0 0
    %74 = vmatpush1.bf16.msra.mxu0 0
    %75 = vmatprep.subr.bf16.mxu0 0
    %76 = vmatpush1.bf16.msra.mxu0 0
    %77 = vmatprep.subr.bf16.mxu0 0
    %78 = vmatpush1.bf16.msra.mxu0 0
    %79 = vmatprep.subr.bf16.mxu0 0
    %80 = vmatpush1.bf16.msra.mxu0 0
    %81 = vmatprep.subr.bf16.mxu0 0
    %82 = vmatpush1.bf16.msra.mxu0 0
    %83 = vmatprep.subr.bf16.mxu0 0
    %84 = vmatpush1.bf16.msra.mxu0 0
    %85 = vmatprep.subr.bf16.mxu0 0
    %86 = vmatpush1.bf16.msra.mxu0 0
    %87 = vmatprep.subr.bf16.mxu0 0
    %88 = vmatpush1.bf16.msra.mxu0 0
    %89 = vmatprep.mubr.bf16.mxu0 0
    %90 = vmatmul.mubr.bf16.gmra.mrb[0].mxu0 %v55
    %v91 = vpop.f32.mrb[0].mxu0
    %v92 = vadd.f32 %v39, %v91
    %v93 = vpop.f32.mrb[0].mxu0
    %v94 = vpop.f32.mrb[0].mxu0
    %v95 = vpop.f32.mrb[0].mxu0
    %96 = vdwg.mxu0
    %v97 = vmax.f32 %v92, 0.0
    %98 = vst [vmem:[#allocation5] sm:$0xff] %v97
    // Predicated region
    $region18: #{tpu_custom_call.1} parent=1 // pred_check
      _
    $region19: #{tpu_custom_call.1} parent=1 // pred_check_branch
      %100 = sbr.rel (0) target = $region21
    $region20: #{tpu_custom_call.1} parent=1 // pred_region
      %s102 = ssub.s32 128, 128
      %103 = vsyncadd [#allocation4], %s102
      %s105 = sshll.u32 [#allocation5], 4
      %s106 = int_to_ptr.vmem [resolvable:$true] %s105
      %108 = dma.vmem_to_hbm [thread:$0]  %s106, 128, %s3, [#allocation4]
    $region21: #{tpu_custom_call.1} parent=1 // pred_fallthru
      _
    // Predicated region
    $region22: #{tpu_custom_call.1} parent=1 // pred_check
      _
    $region23: #{tpu_custom_call.1} parent=1 // pred_check_branch
      %110 = sbr.rel (0) target = $region25
    $region24: #{tpu_custom_call.1} parent=1 // pred_region
      %111 = dma.done [#allocation4], 128
    $region25: #{tpu_custom_call.1} parent=1 // pred_fallthru
      _
    %112 = vsyncpa [#allocation3], 1
    %113 = vsyncpa [#allocation4], 1

</llo_original>
